<compile_context>
chip_gen: v7x
topology: tpu7x:2x2x1
jax: 0.10.0
libtpu: 0.0.40
codegen_flags: <defaults>
</compile_context>

<pallas_src>
import jax
import jax.numpy as jnp
from jax.experimental import pallas as pl
from jax.experimental.pallas import tpu as pltpu


def _prompt_kernel(emb_ref, w1_ref, b1_ref, w2_ref, b2_ref, o_ref):
    # emb_ref: (TP, D) bf16  embedding rows for this P-tile (== arange tokens)
    # w1_ref : (D, D)  bf16  Linear1 weight, (in, out) layout
    # b1_ref : (1, D)  f32
    # w2_ref : (D, D)  bf16  Linear2 weight, (in, out) layout
    # b2_ref : (1, D)  f32
    # o_ref  : (TP, D) f32   batch-invariant output tile
    h = jnp.tanh(
        jnp.dot(emb_ref[...], w1_ref[...], preferred_element_type=jnp.float32)
        + b1_ref[...]
    )
    o_ref[...] = (
        jnp.dot(h.astype(w2_ref.dtype), w2_ref[...],
                preferred_element_type=jnp.float32)
        + b2_ref[...]
    ).astype(o_ref.dtype)


def _vmem_capacity_bytes():
    try:
        return int(pltpu.get_tpu_info().vmem_capacity_bytes)
    except Exception:
        return 64 * 1024 * 1024  # conservative default: v7x per-TC VMEM


def _choose_tile_p(prompt_len, input_dim, vmem_capacity):
    """Largest sublane-aligned P-tile whose pipelined resident set fits VMEM,
    capped at 512 rows and split so the parallel P axis has >= 2 tiles
    (v7x megacore) whenever the prompt is long enough."""
    bf16_b, f32_b = 2, 4
    budget = vmem_capacity // 2  # headroom for compiler scratch / semaphores
    fixed = (2 * input_dim * input_dim * bf16_b    # w1 + w2 (single buffer)
             + 2 * 2 * input_dim * f32_b)          # biases (double buffer)
    per_row = input_dim * (2 * bf16_b + 2 * f32_b)  # emb + out, double-buffered
    max_rows = max(8, (budget - fixed) // max(per_row, 1))

    if prompt_len < 16:
        return prompt_len  # block == full array dim: always a legal layout

    tile_cap = max(8, (min(512, int(max_rows)) // 8) * 8)
    n_tiles = max(2, pl.cdiv(prompt_len, tile_cap))       # >= 2 for megacore
    tile_p = max(8, pl.cdiv(pl.cdiv(prompt_len, n_tiles), 8) * 8)
    return min(tile_p, tile_cap)


def _build_prompt_call(prompt_len, input_dim, tile_p, vmem_capacity,
                       single_buffer_weights):
    bf16_b, f32_b = 2, 4
    wbuf = 1 if single_buffer_weights else 2
    resident = (2 * tile_p * input_dim * bf16_b             # emb tile (2 bufs)
                + wbuf * 2 * input_dim * input_dim * bf16_b  # w1, w2
                + 2 * 2 * input_dim * f32_b                  # biases
                + 2 * tile_p * input_dim * f32_b)            # out tile (2 bufs)
    cap = (48 * 1024 * 1024 if vmem_capacity <= 64 * 1024 * 1024
           else 96 * 1024 * 1024)
    vmem_limit = min(max(resident + resident // 2 + 2 * 1024 * 1024,
                         16 * 1024 * 1024), cap)

    wspec_kwargs = {}
    if single_buffer_weights:
        # Constant-index weights never change across the grid: one buffer.
        wspec_kwargs["pipeline_mode"] = pl.Buffered(1)
    w_spec = pl.BlockSpec((input_dim, input_dim), lambda p: (0, 0),
                          **wspec_kwargs)
    b_spec = pl.BlockSpec((1, input_dim), lambda p: (0, 0))

    num_p_tiles = pl.cdiv(prompt_len, tile_p)
    return pl.pallas_call(
        _prompt_kernel,
        out_shape=jax.ShapeDtypeStruct((prompt_len, input_dim), jnp.float32),
        grid_spec=pltpu.PrefetchScalarGridSpec(
            num_scalar_prefetch=0,
            grid=(num_p_tiles,),
            in_specs=[
                pl.BlockSpec((tile_p, input_dim), lambda p: (p, 0)),
                w_spec,
                b_spec,
                w_spec,
                b_spec,
            ],
            out_specs=pl.BlockSpec((tile_p, input_dim), lambda p: (p, 0)),
        ),
        compiler_params=pltpu.CompilerParams(
            dimension_semantics=("parallel",),
            vmem_limit_bytes=vmem_limit,
        ),
    )


def input_prompts_forward(bsz, emb_table, w1, b1, w2, b2, *, tile_p=None):
    """Prefix prompt of shape (bsz, prompt_len, input_dim), float32."""
    prompt_len, input_dim = emb_table.shape
    vmem_capacity = _vmem_capacity_bytes()
    if tile_p is None:
        tile_p = _choose_tile_p(prompt_len, input_dim, vmem_capacity)

    # bf16 MXU inputs, f32 biases / accumulation.
    emb_bf = emb_table.astype(jnp.bfloat16)
    w1_bf = w1.astype(jnp.bfloat16)
    w2_bf = w2.astype(jnp.bfloat16)
    b1_2d = b1.reshape(1, input_dim).astype(jnp.float32)
    b2_2d = b2.reshape(1, input_dim).astype(jnp.float32)
    args = (emb_bf, w1_bf, b1_2d, w2_bf, b2_2d)

    try:
        prompt = _build_prompt_call(prompt_len, input_dim, tile_p,
                                    vmem_capacity, True)(*args)
    except Exception:
        # Fallback if this JAX build rejects pl.Buffered(1) on constant blocks.
        prompt = _build_prompt_call(prompt_len, input_dim, tile_p,
                                    vmem_capacity, False)(*args)

    # The prompt is identical for every batch element; let XLA broadcast it
    # (up to bsz x fewer HBM writes from the kernel).
    return jnp.broadcast_to(prompt[None], (bsz, prompt_len, input_dim))


def make_params(prompt_len, input_dim, key):
    """Deterministic synthetic parameters (xavier-normal-ish init)."""
    k_emb, k_w1, k_b1, k_w2, k_b2 = jax.random.split(key, 5)
    # nn.Embedding default init: N(0, 1)
    emb_table = jax.random.normal(k_emb, (prompt_len, input_dim), jnp.float32)
    # nn.Linear weights stored as (in_dim, out_dim) == W.T of PyTorch layout
    xavier_std = (2.0 / (input_dim + input_dim)) ** 0.5
    w1 = jax.random.normal(k_w1, (input_dim, input_dim), jnp.float32) * xavier_std
    w2 = jax.random.normal(k_w2, (input_dim, input_dim), jnp.float32) * xavier_std
    bound = 1.0 / (input_dim ** 0.5)
    b1 = jax.random.uniform(k_b1, (input_dim,), jnp.float32, -bound, bound)
    b2 = jax.random.uniform(k_b2, (input_dim,), jnp.float32, -bound, bound)
    return emb_table, w1, b1, w2, b2


if __name__ == "__main__":
    prompt_len = 8
    input_dim = 32
    bsz = 2

    key = jax.random.PRNGKey(0)
    emb_table, w1, b1, w2, b2 = make_params(prompt_len, input_dim, key)

    out = jax.block_until_ready(
        input_prompts_forward(bsz, emb_table, w1, b1, w2, b2)
    )

    # Reference in plain JAX, mirroring the kernel's mixed precision
    # (bf16 MXU inputs, f32 accumulation / biases).
    e32 = emb_table.astype(jnp.bfloat16).astype(jnp.float32)
    w1_32 = w1.astype(jnp.bfloat16).astype(jnp.float32)
    w2_32 = w2.astype(jnp.bfloat16).astype(jnp.float32)
    h = jnp.tanh(e32 @ w1_32 + b1)
    ref_single = h.astype(jnp.bfloat16).astype(jnp.float32) @ w2_32 + b2
    ref = jnp.broadcast_to(ref_single[None], (bsz, prompt_len, input_dim))

    assert out.shape == (bsz, prompt_len, input_dim)
    assert out.dtype == jnp.float32
    assert jnp.allclose(out, ref, atol=2e-2, rtol=2e-2)

    print("KERNEL_OK")
</pallas_src>

<mosaic_0001>
module attributes {stable_mosaic.version = 11 : i64} {
  func.func @_prompt_kernel(%arg0: i32, %arg1: memref<8x32xbf16, #tpu.memory_space<vmem>>, %arg2: memref<32x32xbf16, #tpu.memory_space<vmem>>, %arg3: memref<1x32xf32, #tpu.memory_space<vmem>>, %arg4: memref<32x32xbf16, #tpu.memory_space<vmem>>, %arg5: memref<1x32xf32, #tpu.memory_space<vmem>>, %arg6: memref<8x32xf32, #tpu.memory_space<vmem>>) attributes {dimension_semantics = [#tpu.dimension_semantics<parallel>], iteration_bounds = array<i64: 1>, scalar_prefetch = 0 : i64, scratch_operands = 0 : i64, tpu.core_type = #tpu.core_type<tc>, window_params = [{transform_indices = @transform_0, window_bounds = array<i64: 8, 32>}, {pipeline_mode = #tpu.pipeline_mode<synchronous>, transform_indices = @transform_1, window_bounds = array<i64: 32, 32>}, {pipeline_mode = #tpu.pipeline_mode<synchronous>, transform_indices = @transform_2, window_bounds = array<i64: 1, 32>}, {pipeline_mode = #tpu.pipeline_mode<synchronous>, transform_indices = @transform_3, window_bounds = array<i64: 32, 32>}, {pipeline_mode = #tpu.pipeline_mode<synchronous>, transform_indices = @transform_4, window_bounds = array<i64: 1, 32>}, {transform_indices = @transform_5, window_bounds = array<i64: 8, 32>}]} {
    %c0 = arith.constant 0 : index
    %c0_0 = arith.constant 0 : index
    %0 = vector.load %arg1[%c0, %c0_0] : memref<8x32xbf16, #tpu.memory_space<vmem>>, vector<8x32xbf16>
    %c0_1 = arith.constant 0 : index
    %c0_2 = arith.constant 0 : index
    %1 = vector.load %arg2[%c0_1, %c0_2] : memref<32x32xbf16, #tpu.memory_space<vmem>>, vector<32x32xbf16>
    %cst = arith.constant dense<0.000000e+00> : vector<8x32xf32>
    %2 = tpu.matmul %0, %1, %cst {dimension_numbers = #tpu.dot_dimension_numbers<[1], [0], [0], [1], [0, 0, 1, 1], [], []>} : vector<8x32xbf16>, vector<32x32xbf16>, vector<8x32xf32> -> vector<8x32xf32>
    %c0_3 = arith.constant 0 : index
    %c0_4 = arith.constant 0 : index
    %3 = vector.load %arg3[%c0_3, %c0_4] : memref<1x32xf32, #tpu.memory_space<vmem>>, vector<1x32xf32>
    %4 = vector.broadcast %3 : vector<1x32xf32> to vector<8x32xf32>
    %5 = arith.addf %2, %4 : vector<8x32xf32>
    %6 = math.tanh %5 : vector<8x32xf32>
    %7 = arith.truncf %6 : vector<8x32xf32> to vector<8x32xbf16>
    %c0_5 = arith.constant 0 : index
    %c0_6 = arith.constant 0 : index
    %8 = vector.load %arg4[%c0_5, %c0_6] : memref<32x32xbf16, #tpu.memory_space<vmem>>, vector<32x32xbf16>
    %cst_7 = arith.constant dense<0.000000e+00> : vector<8x32xf32>
    %9 = tpu.matmul %7, %8, %cst_7 {dimension_numbers = #tpu.dot_dimension_numbers<[1], [0], [0], [1], [0, 0, 1, 1], [], []>} : vector<8x32xbf16>, vector<32x32xbf16>, vector<8x32xf32> -> vector<8x32xf32>
    %c0_8 = arith.constant 0 : index
    %c0_9 = arith.constant 0 : index
    %10 = vector.load %arg5[%c0_8, %c0_9] : memref<1x32xf32, #tpu.memory_space<vmem>>, vector<1x32xf32>
    %11 = vector.broadcast %10 : vector<1x32xf32> to vector<8x32xf32>
    %12 = arith.addf %9, %11 : vector<8x32xf32>
    %c0_10 = arith.constant 0 : index
    %c0_11 = arith.constant 0 : index
    %13 = vector.load %arg6[%c0_10, %c0_11] : memref<8x32xf32, #tpu.memory_space<vmem>>, vector<8x32xf32>
    tpu.vector_store %arg6[%c0_10, %c0_11], %12 {strides = array<i32>} : memref<8x32xf32, #tpu.memory_space<vmem>>, vector<8x32xf32>,
    return
  }
  func.func @transform_0(%arg0: i32) -> (i32, i32) {
    %c0_i32 = arith.constant 0 : i32
    %c0_i32_0 = arith.constant 0 : i32
    return %arg0, %c0_i32 : i32, i32
  }
  func.func @transform_1(%arg0: i32) -> (i32, i32) {
    %c0_i32 = arith.constant 0 : i32
    %c0_i32_0 = arith.constant 0 : i32
    %c0_i32_1 = arith.constant 0 : i32
    return %c0_i32, %c0_i32_0 : i32, i32
  }
  func.func @transform_2(%arg0: i32) -> (i32, i32) {
    %c0_i32 = arith.constant 0 : i32
    %c0_i32_0 = arith.constant 0 : i32
    %c0_i32_1 = arith.constant 0 : i32
    return %c0_i32, %c0_i32_0 : i32, i32
  }
  func.func @transform_3(%arg0: i32) -> (i32, i32) {
    %c0_i32 = arith.constant 0 : i32
    %c0_i32_0 = arith.constant 0 : i32
    %c0_i32_1 = arith.constant 0 : i32
    return %c0_i32, %c0_i32_0 : i32, i32
  }
  func.func @transform_4(%arg0: i32) -> (i32, i32) {
    %c0_i32 = arith.constant 0 : i32
    %c0_i32_0 = arith.constant 0 : i32
    %c0_i32_1 = arith.constant 0 : i32
    return %c0_i32, %c0_i32_0 : i32, i32
  }
  func.func @transform_5(%arg0: i32) -> (i32, i32) {
    %c0_i32 = arith.constant 0 : i32
    %c0_i32_0 = arith.constant 0 : i32
    return %arg0, %c0_i32 : i32, i32
  }
}

module attributes {stable_mosaic.version = 11 : i64} {
  func.func @_prompt_kernel(%arg0: i32, %arg1: memref<8x32xbf16, #tpu.memory_space<vmem>>, %arg2: memref<32x32xbf16, #tpu.memory_space<vmem>>, %arg3: memref<1x32xf32, #tpu.memory_space<vmem>>, %arg4: memref<32x32xbf16, #tpu.memory_space<vmem>>, %arg5: memref<1x32xf32, #tpu.memory_space<vmem>>, %arg6: memref<8x32xf32, #tpu.memory_space<vmem>>) attributes {dimension_semantics = [#tpu.dimension_semantics<parallel>], iteration_bounds = array<i64: 1>, scalar_prefetch = 0 : i64, scratch_operands = 0 : i64, tpu.core_type = #tpu.core_type<tc>, window_params = [{transform_indices = @transform_0, window_bounds = array<i64: 8, 32>}, {pipeline_mode = #tpu.pipeline_mode<synchronous>, transform_indices = @transform_1, window_bounds = array<i64: 32, 32>}, {pipeline_mode = #tpu.pipeline_mode<synchronous>, transform_indices = @transform_2, window_bounds = array<i64: 1, 32>}, {pipeline_mode = #tpu.pipeline_mode<synchronous>, transform_indices = @transform_3, window_bounds = array<i64: 32, 32>}, {pipeline_mode = #tpu.pipeline_mode<synchronous>, transform_indices = @transform_4, window_bounds = array<i64: 1, 32>}, {transform_indices = @transform_5, window_bounds = array<i64: 8, 32>}]} {
    %c0 = arith.constant 0 : index
    %c0_0 = arith.constant 0 : index
    %0 = vector.load %arg1[%c0, %c0_0] : memref<8x32xbf16, #tpu.memory_space<vmem>>, vector<8x32xbf16>
    %c0_1 = arith.constant 0 : index
    %c0_2 = arith.constant 0 : index
    %1 = vector.load %arg2[%c0_1, %c0_2] : memref<32x32xbf16, #tpu.memory_space<vmem>>, vector<32x32xbf16>
    %cst = arith.constant dense<0.000000e+00> : vector<8x32xf32>
    %2 = tpu.matmul %0, %1, %cst {dimension_numbers = #tpu.dot_dimension_numbers<[1], [0], [0], [1], [0, 0, 1, 1], [], []>} : vector<8x32xbf16>, vector<32x32xbf16>, vector<8x32xf32> -> vector<8x32xf32>
    %c0_3 = arith.constant 0 : index
    %c0_4 = arith.constant 0 : index
    %3 = vector.load %arg3[%c0_3, %c0_4] : memref<1x32xf32, #tpu.memory_space<vmem>>, vector<1x32xf32>
    %4 = vector.broadcast %3 : vector<1x32xf32> to vector<8x32xf32>
    %5 = arith.addf %2, %4 : vector<8x32xf32>
    %6 = math.tanh %5 : vector<8x32xf32>
    %7 = arith.truncf %6 : vector<8x32xf32> to vector<8x32xbf16>
    %c0_5 = arith.constant 0 : index
    %c0_6 = arith.constant 0 : index
    %8 = vector.load %arg4[%c0_5, %c0_6] : memref<32x32xbf16, #tpu.memory_space<vmem>>, vector<32x32xbf16>
    %cst_7 = arith.constant dense<0.000000e+00> : vector<8x32xf32>
    %9 = tpu.matmul %7, %8, %cst_7 {dimension_numbers = #tpu.dot_dimension_numbers<[1], [0], [0], [1], [0, 0, 1, 1], [], []>} : vector<8x32xbf16>, vector<32x32xbf16>, vector<8x32xf32> -> vector<8x32xf32>
    %c0_8 = arith.constant 0 : index
    %c0_9 = arith.constant 0 : index
    %10 = vector.load %arg5[%c0_8, %c0_9] : memref<1x32xf32, #tpu.memory_space<vmem>>, vector<1x32xf32>
    %11 = vector.broadcast %10 : vector<1x32xf32> to vector<8x32xf32>
    %12 = arith.addf %9, %11 : vector<8x32xf32>
    %c0_10 = arith.constant 0 : index
    %c0_11 = arith.constant 0 : index
    %13 = vector.load %arg6[%c0_10, %c0_11] : memref<8x32xf32, #tpu.memory_space<vmem>>, vector<8x32xf32>
    tpu.vector_store %arg6[%c0_10, %c0_11], %12 {strides = array<i32>} : memref<8x32xf32, #tpu.memory_space<vmem>>, vector<8x32xf32>,
    return
  }
  func.func @transform_0(%arg0: i32) -> (i32, i32) {
    %c0_i32 = arith.constant 0 : i32
    %c0_i32_0 = arith.constant 0 : i32
    return %arg0, %c0_i32 : i32, i32
  }
  func.func @transform_1(%arg0: i32) -> (i32, i32) {
    %c0_i32 = arith.constant 0 : i32
    %c0_i32_0 = arith.constant 0 : i32
    %c0_i32_1 = arith.constant 0 : i32
    return %c0_i32, %c0_i32_0 : i32, i32
  }
  func.func @transform_2(%arg0: i32) -> (i32, i32) {
    %c0_i32 = arith.constant 0 : i32
    %c0_i32_0 = arith.constant 0 : i32
    %c0_i32_1 = arith.constant 0 : i32
    return %c0_i32, %c0_i32_0 : i32, i32
  }
  func.func @transform_3(%arg0: i32) -> (i32, i32) {
    %c0_i32 = arith.constant 0 : i32
    %c0_i32_0 = arith.constant 0 : i32
    %c0_i32_1 = arith.constant 0 : i32
    return %c0_i32, %c0_i32_0 : i32, i32
  }
  func.func @transform_4(%arg0: i32) -> (i32, i32) {
    %c0_i32 = arith.constant 0 : i32
    %c0_i32_0 = arith.constant 0 : i32
    %c0_i32_1 = arith.constant 0 : i32
    return %c0_i32, %c0_i32_0 : i32, i32
  }
  func.func @transform_5(%arg0: i32) -> (i32, i32) {
    %c0_i32 = arith.constant 0 : i32
    %c0_i32_0 = arith.constant 0 : i32
    return %arg0, %c0_i32 : i32, i32
  }
}

</mosaic_0001>

<llo_original>
// kernel: tpu_custom_call.1
$region0: #{tpu_custom_call.1}
  #allocation0 [shape = 'u32[]', space=smem, size = 0x4, offset = 0x4, fixed_abs, tag = 'smem constant byte address 0x4 - core index']
  #allocation1 [shape = 'u32[144,128]{1,0:T(1,128)}', space=vmem, size = 0x12000, scoped, tag = 'internal scratch']
  %s0 = inlined_call_operand.hbm [shape: bf16[8,32], index: 0, kind: input, shape index: {}]
  %s1 = inlined_call_operand.hbm [shape: bf16[32,32], index: 1, kind: input, shape index: {}]
  %s2 = inlined_call_operand.vmem [shape: f32[1,32], index: 2, kind: input, shape index: {}]
  %s3 = inlined_call_operand.hbm [shape: bf16[32,32], index: 3, kind: input, shape index: {}]
  %s4 = inlined_call_operand.vmem [shape: f32[1,32], index: 4, kind: input, shape index: {}]
  %s5 = inlined_call_operand.hbm [shape: f32[8,32], index: 5, kind: output, shape index: {}]
  %s6 = sld [smem:[#allocation0]]
  $region42: #{tpu_custom_call.1} parent=0
    _
  %s8 = ssub.s32 1, %s6
  %s9 = scalar_select 0, %s8, %s6
  $region1: #{tpu_custom_call.1} parent=0
    #allocation2 [shape = 'u8[2048]{0}', space=vmem, size = 0x800, scoped, tag = 'input window, operand 0, single buffered']
    #allocation3 [shape = 's32[1]{0}', space=sflag, size = 0x4, scoped, tag = 'scoped memory for tpu_custom_call.1']
    #allocation4 [shape = 's32[1]{0}', space=sflag, size = 0x4, scoped, tag = 'scoped memory for tpu_custom_call.1']
    #allocation5 [shape = 'u8[8192]{0}', space=vmem, size = 0x2000, scoped, tag = 'input window, operand 1, single buffered']
    #allocation6 [shape = 's32[1]{0}', space=sflag, size = 0x4, scoped, tag = 'scoped memory for tpu_custom_call.1']
    #allocation7 [shape = 'u8[8192]{0}', space=vmem, size = 0x2000, scoped, tag = 'input window, operand 3, single buffered']
    #allocation8 [shape = 'u8[4096]{0}', space=vmem, size = 0x1000, scoped, tag = 'output window, operand 0, single buffered']
    %10 = vsyncpa [#allocation3], 0
    %11 = vsyncpa [#allocation6], 0
    %12 = vsyncpa [#allocation4], 0
    // Predicated region
    $region2: #{tpu_custom_call.1} parent=1 // pred_check
      _
    $region3: #{tpu_custom_call.1} parent=1 // pred_check_branch
      %14 = sbr.rel (0) target = $region5
    $region4: #{tpu_custom_call.1} parent=1 // pred_region
      %s16 = ssub.s32 64, 64
      %17 = vsyncadd [#allocation3], %s16
      %s19 = sshll.u32 [#allocation2], 4
      %s20 = int_to_ptr.vmem [resolvable:$true] %s19
      %22 = dma.hbm_to_vmem [thread:$0]  %s0, 64, %s20, [#allocation3]
    $region5: #{tpu_custom_call.1} parent=1 // pred_fallthru
      _
    // Predicated region
    $region6: #{tpu_custom_call.1} parent=1 // pred_check
      _
    $region7: #{tpu_custom_call.1} parent=1 // pred_check_branch
      %24 = sbr.rel (0) target = $region9
    $region8: #{tpu_custom_call.1} parent=1 // pred_region
      %s26 = ssub.s32 256, 256
      %27 = vsyncadd [#allocation6], %s26
      %s28 = sshll.u32 [#allocation5], 4
      %s29 = int_to_ptr.vmem [resolvable:$true] %s28
      %34 = dma.hbm_to_vmem [thread:$0]  %s1, 256, %s29, [#allocation6], 64, 64, 4
    $region9: #{tpu_custom_call.1} parent=1 // pred_fallthru
      _
    // Predicated region
    $region10: #{tpu_custom_call.1} parent=1 // pred_check
      _
    $region11: #{tpu_custom_call.1} parent=1 // pred_check_branch
      %36 = sbr.rel (0) target = $region13
    $region12: #{tpu_custom_call.1} parent=1 // pred_region
      _
    $region13: #{tpu_custom_call.1} parent=1 // pred_fallthru
      _
    // Predicated region
    $region14: #{tpu_custom_call.1} parent=1 // pred_check
      _
    $region15: #{tpu_custom_call.1} parent=1 // pred_check_branch
      %38 = sbr.rel (0) target = $region17
    $region16: #{tpu_custom_call.1} parent=1 // pred_region
      %s40 = ssub.s32 256, 256
      %41 = vsyncadd [#allocation6], %s40
      %s42 = sshll.u32 [#allocation7], 4
      %s43 = int_to_ptr.vmem [resolvable:$true] %s42
      %48 = dma.hbm_to_vmem [thread:$0]  %s3, 256, %s43, [#allocation6], 64, 64, 4
    $region17: #{tpu_custom_call.1} parent=1 // pred_fallthru
      _
    // Predicated region
    $region18: #{tpu_custom_call.1} parent=1 // pred_check
      _
    $region19: #{tpu_custom_call.1} parent=1 // pred_check_branch
      %50 = sbr.rel (0) target = $region21
    $region20: #{tpu_custom_call.1} parent=1 // pred_region
      _
    $region21: #{tpu_custom_call.1} parent=1 // pred_fallthru
      _
    // Predicated region
    $region22: #{tpu_custom_call.1} parent=1 // pred_check
      _
    $region23: #{tpu_custom_call.1} parent=1 // pred_check_branch
      %52 = sbr.rel (0) target = $region25
    $region24: #{tpu_custom_call.1} parent=1 // pred_region
      %53 = dma.done [#allocation3], 64
    $region25: #{tpu_custom_call.1} parent=1 // pred_fallthru
      _
    // Predicated region
    $region26: #{tpu_custom_call.1} parent=1 // pred_check
      _
    $region27: #{tpu_custom_call.1} parent=1 // pred_check_branch
      %55 = sbr.rel (0) target = $region29
    $region28: #{tpu_custom_call.1} parent=1 // pred_region
      %56 = dma.done [#allocation6], 256
    $region29: #{tpu_custom_call.1} parent=1 // pred_fallthru
      _
    // Predicated region
    $region30: #{tpu_custom_call.1} parent=1 // pred_check
      _
    $region31: #{tpu_custom_call.1} parent=1 // pred_check_branch
      %58 = sbr.rel (0) target = $region33
    $region32: #{tpu_custom_call.1} parent=1 // pred_region
      %59 = dma.done [#allocation6], 256
    $region33: #{tpu_custom_call.1} parent=1 // pred_fallthru
      _
    %v61 = vld [vmem:[#allocation2] sm:$0xf]
    %v62 = vld [vmem:[#allocation5] sm:$0xf]
    %v63 = vld [vmem:[#allocation5 + $0x4] sm:$0xf]
    %v64 = vld [vmem:[#allocation5 + $0x8] sm:$0xf]
    %v65 = vld [vmem:[#allocation5 + $0xc] sm:$0xf]
    %v66 = vld [vmem:[%s2] sm:$0x1]
    %v68 = vlaneseq
    %v69 = vshrl.u32 %v68, 7
    %v70 = vsub.s32 0, %v69
    %v71 = vrot.slane %v66, %v70
    %v77 = vunpack.c.l.b16 %v62
    %v78 = vunpack.c.l.b16 %v63
    %v79 = vunpack.c.l.b16 %v64
    %v80 = vunpack.c.l.b16 %v65
    %v81 = vpack.c.b16 %v78, %v77
    %v82 = vpack.c.b16 %v80, %v79
    %vm85 = vcmask 261120
    %v87 = vsel %vm85, %v61, 0
    %89 = vmatprep.subr.bf16.mxu0 0
    %90 = vmatpush1.bf16.msra.mxu0 %v81
    %91 = vmatprep.subr.bf16.mxu0 0
    %92 = vmatpush1.bf16.msra.mxu0 %v82
    %93 = vmatprep.subr.bf16.mxu0 0
    %94 = vmatpush1.bf16.msra.mxu0 0
    %95 = vmatprep.subr.bf16.mxu0 0
    %96 = vmatpush1.bf16.msra.mxu0 0
    %97 = vmatprep.subr.bf16.mxu0 0
    %98 = vmatpush1.bf16.msra.mxu0 0
    %99 = vmatprep.subr.bf16.mxu0 0
    %100 = vmatpush1.bf16.msra.mxu0 0
    %101 = vmatprep.subr.bf16.mxu0 0
    %102 = vmatpush1.bf16.msra.mxu0 0
    %103 = vmatprep.subr.bf16.mxu0 0
    %104 = vmatpush1.bf16.msra.mxu0 0
    %105 = vmatprep.subr.bf16.mxu0 0
    %106 = vmatpush1.bf16.msra.mxu0 0
    %107 = vmatprep.subr.bf16.mxu0 0
    %108 = vmatpush1.bf16.msra.mxu0 0
    %109 = vmatprep.subr.bf16.mxu0 0
    %110 = vmatpush1.bf16.msra.mxu0 0
    %111 = vmatprep.subr.bf16.mxu0 0
    %112 = vmatpush1.bf16.msra.mxu0 0
    %113 = vmatprep.subr.bf16.mxu0 0
    %114 = vmatpush1.bf16.msra.mxu0 0
    %115 = vmatprep.subr.bf16.mxu0 0
    %116 = vmatpush1.bf16.msra.mxu0 0
    %117 = vmatprep.subr.bf16.mxu0 0
    %118 = vmatpush1.bf16.msra.mxu0 0
    %119 = vmatprep.subr.bf16.mxu0 0
    %120 = vmatpush1.bf16.msra.mxu0 0
    %121 = vmatprep.mubr.bf16.mxu0 0
    %122 = vmatmul.mubr.bf16.gmra.mrb[0].mxu0 %v87
    %v123 = vpop.f32.mrb[0].mxu0
    %v124 = vadd.f32 %v71, %v123
    %v125 = vpop.f32.mrb[0].mxu0
    %v126 = vpop.f32.mrb[0].mxu0
    %v127 = vpop.f32.mrb[0].mxu0
    %128 = vdwg.mxu0
    %v129 = vtanh.pop %v124
    %v130 = vpack.c.bf16 %v129, %v129
    %v131 = vld [vmem:[#allocation7] sm:$0xf]
    %v132 = vld [vmem:[#allocation7 + $0x4] sm:$0xf]
    %v133 = vld [vmem:[#allocation7 + $0x8] sm:$0xf]
    %v134 = vld [vmem:[#allocation7 + $0xc] sm:$0xf]
    %v135 = vld [vmem:[%s4] sm:$0x1]
    %v137 = vlaneseq
    %v138 = vshrl.u32 %v137, 7
    %v139 = vsub.s32 0, %v138
    %v140 = vrot.slane %v135, %v139
    %v146 = vunpack.c.l.b16 %v131
    %v147 = vunpack.c.l.b16 %v132
    %v148 = vunpack.c.l.b16 %v133
    %v149 = vunpack.c.l.b16 %v134
    %v150 = vpack.c.b16 %v147, %v146
    %v151 = vpack.c.b16 %v149, %v148
    %v155 = vsel %vm85, %v130, 0
    %157 = vmatprep.subr.bf16.mxu0 0
    %158 = vmatpush1.bf16.msra.mxu0 %v150
    %159 = vmatprep.subr.bf16.mxu0 0
    %160 = vmatpush1.bf16.msra.mxu0 %v151
    %161 = vmatprep.subr.bf16.mxu0 0
    %162 = vmatpush1.bf16.msra.mxu0 0
    %163 = vmatprep.subr.bf16.mxu0 0
    %164 = vmatpush1.bf16.msra.mxu0 0
    %165 = vmatprep.subr.bf16.mxu0 0
    %166 = vmatpush1.bf16.msra.mxu0 0
    %167 = vmatprep.subr.bf16.mxu0 0
    %168 = vmatpush1.bf16.msra.mxu0 0
    %169 = vmatprep.subr.bf16.mxu0 0
    %170 = vmatpush1.bf16.msra.mxu0 0
    %171 = vmatprep.subr.bf16.mxu0 0
    %172 = vmatpush1.bf16.msra.mxu0 0
    %173 = vmatprep.subr.bf16.mxu0 0
    %174 = vmatpush1.bf16.msra.mxu0 0
    %175 = vmatprep.subr.bf16.mxu0 0
    %176 = vmatpush1.bf16.msra.mxu0 0
    %177 = vmatprep.subr.bf16.mxu0 0
    %178 = vmatpush1.bf16.msra.mxu0 0
    %179 = vmatprep.subr.bf16.mxu0 0
    %180 = vmatpush1.bf16.msra.mxu0 0
    %181 = vmatprep.subr.bf16.mxu0 0
    %182 = vmatpush1.bf16.msra.mxu0 0
    %183 = vmatprep.subr.bf16.mxu0 0
    %184 = vmatpush1.bf16.msra.mxu0 0
    %185 = vmatprep.subr.bf16.mxu0 0
    %186 = vmatpush1.bf16.msra.mxu0 0
    %187 = vmatprep.subr.bf16.mxu0 0
    %188 = vmatpush1.bf16.msra.mxu0 0
    %189 = vmatprep.mubr.bf16.mxu0 0
    %190 = vmatmul.mubr.bf16.gmra.mrb[0].mxu0 %v155
    %v191 = vpop.f32.mrb[0].mxu0
    %v192 = vadd.f32 %v140, %v191
    %v193 = vpop.f32.mrb[0].mxu0
    %v194 = vpop.f32.mrb[0].mxu0
    %v195 = vpop.f32.mrb[0].mxu0
    %196 = vdwg.mxu0
    %197 = vst.msk [vmem:[#allocation8] sm:$0xff] %vm85, %v192
    // Predicated region
    $region34: #{tpu_custom_call.1} parent=1 // pred_check
      _
    $region35: #{tpu_custom_call.1} parent=1 // pred_check_branch
      %199 = sbr.rel (0) target = $region37
    $region36: #{tpu_custom_call.1} parent=1 // pred_region
      %s201 = ssub.s32 128, 128
      %202 = vsyncadd [#allocation4], %s201
      %s204 = sshll.u32 [#allocation8], 4
      %s205 = int_to_ptr.vmem [resolvable:$true] %s204
      %207 = dma.vmem_to_hbm [thread:$0]  %s205, 128, %s5, [#allocation4]
    $region37: #{tpu_custom_call.1} parent=1 // pred_fallthru
      _
    // Predicated region
    $region38: #{tpu_custom_call.1} parent=1 // pred_check
      _
    $region39: #{tpu_custom_call.1} parent=1 // pred_check_branch
      %209 = sbr.rel (0) target = $region41
    $region40: #{tpu_custom_call.1} parent=1 // pred_region
      %210 = dma.done [#allocation4], 128
    $region41: #{tpu_custom_call.1} parent=1 // pred_fallthru
      _
    %211 = vsyncpa [#allocation3], 1
    %212 = vsyncpa [#allocation6], 1
    %213 = vsyncpa [#allocation4], 1

// kernel: tpu_custom_call.1
$region0: #{tpu_custom_call.1}
  #allocation0 [shape = 'u32[]', space=smem, size = 0x4, offset = 0x4, fixed_abs, tag = 'smem constant byte address 0x4 - core index']
  #allocation1 [shape = 'u32[144,128]{1,0:T(1,128)}', space=vmem, size = 0x12000, scoped, tag = 'internal scratch']
  %s0 = inlined_call_operand.hbm [shape: bf16[8,32], index: 0, kind: input, shape index: {}]
  %s1 = inlined_call_operand.hbm [shape: bf16[32,32], index: 1, kind: input, shape index: {}]
  %s2 = inlined_call_operand.vmem [shape: f32[1,32], index: 2, kind: input, shape index: {}]
  %s3 = inlined_call_operand.hbm [shape: bf16[32,32], index: 3, kind: input, shape index: {}]
  %s4 = inlined_call_operand.vmem [shape: f32[1,32], index: 4, kind: input, shape index: {}]
  %s5 = inlined_call_operand.hbm [shape: f32[8,32], index: 5, kind: output, shape index: {}]
  %s6 = sld [smem:[#allocation0]]
  $region42: #{tpu_custom_call.1} parent=0
    _
  %s8 = ssub.s32 1, %s6
  %s9 = scalar_select 0, %s8, %s6
  $region1: #{tpu_custom_call.1} parent=0
    #allocation2 [shape = 'u8[2048]{0}', space=vmem, size = 0x800, scoped, tag = 'input window, operand 0, single buffered']
    #allocation3 [shape = 's32[1]{0}', space=sflag, size = 0x4, scoped, tag = 'scoped memory for tpu_custom_call.1']
    #allocation4 [shape = 's32[1]{0}', space=sflag, size = 0x4, scoped, tag = 'scoped memory for tpu_custom_call.1']
    #allocation5 [shape = 'u8[8192]{0}', space=vmem, size = 0x2000, scoped, tag = 'input window, operand 1, single buffered']
    #allocation6 [shape = 's32[1]{0}', space=sflag, size = 0x4, scoped, tag = 'scoped memory for tpu_custom_call.1']
    #allocation7 [shape = 'u8[8192]{0}', space=vmem, size = 0x2000, scoped, tag = 'input window, operand 3, single buffered']
    #allocation8 [shape = 'u8[4096]{0}', space=vmem, size = 0x1000, scoped, tag = 'output window, operand 0, single buffered']
    %10 = vsyncpa [#allocation3], 0
    %11 = vsyncpa [#allocation6], 0
    %12 = vsyncpa [#allocation4], 0
    // Predicated region
    $region2: #{tpu_custom_call.1} parent=1 // pred_check
      _
    $region3: #{tpu_custom_call.1} parent=1 // pred_check_branch
      %14 = sbr.rel (0) target = $region5
    $region4: #{tpu_custom_call.1} parent=1 // pred_region
      %s16 = ssub.s32 64, 64
      %17 = vsyncadd [#allocation3], %s16
      %s19 = sshll.u32 [#allocation2], 4
      %s20 = int_to_ptr.vmem [resolvable:$true] %s19
      %22 = dma.hbm_to_vmem [thread:$0]  %s0, 64, %s20, [#allocation3]
    $region5: #{tpu_custom_call.1} parent=1 // pred_fallthru
      _
    // Predicated region
    $region6: #{tpu_custom_call.1} parent=1 // pred_check
      _
    $region7: #{tpu_custom_call.1} parent=1 // pred_check_branch
      %24 = sbr.rel (0) target = $region9
    $region8: #{tpu_custom_call.1} parent=1 // pred_region
      %s26 = ssub.s32 256, 256
      %27 = vsyncadd [#allocation6], %s26
      %s28 = sshll.u32 [#allocation5], 4
      %s29 = int_to_ptr.vmem [resolvable:$true] %s28
      %34 = dma.hbm_to_vmem [thread:$0]  %s1, 256, %s29, [#allocation6], 64, 64, 4
    $region9: #{tpu_custom_call.1} parent=1 // pred_fallthru
      _
    // Predicated region
    $region10: #{tpu_custom_call.1} parent=1 // pred_check
      _
    $region11: #{tpu_custom_call.1} parent=1 // pred_check_branch
      %36 = sbr.rel (0) target = $region13
    $region12: #{tpu_custom_call.1} parent=1 // pred_region
      _
    $region13: #{tpu_custom_call.1} parent=1 // pred_fallthru
      _
    // Predicated region
    $region14: #{tpu_custom_call.1} parent=1 // pred_check
      _
    $region15: #{tpu_custom_call.1} parent=1 // pred_check_branch
      %38 = sbr.rel (0) target = $region17
    $region16: #{tpu_custom_call.1} parent=1 // pred_region
      %s40 = ssub.s32 256, 256
      %41 = vsyncadd [#allocation6], %s40
      %s42 = sshll.u32 [#allocation7], 4
      %s43 = int_to_ptr.vmem [resolvable:$true] %s42
      %48 = dma.hbm_to_vmem [thread:$0]  %s3, 256, %s43, [#allocation6], 64, 64, 4
    $region17: #{tpu_custom_call.1} parent=1 // pred_fallthru
      _
    // Predicated region
    $region18: #{tpu_custom_call.1} parent=1 // pred_check
      _
    $region19: #{tpu_custom_call.1} parent=1 // pred_check_branch
      %50 = sbr.rel (0) target = $region21
    $region20: #{tpu_custom_call.1} parent=1 // pred_region
      _
    $region21: #{tpu_custom_call.1} parent=1 // pred_fallthru
      _
    // Predicated region
    $region22: #{tpu_custom_call.1} parent=1 // pred_check
      _
    $region23: #{tpu_custom_call.1} parent=1 // pred_check_branch
      %52 = sbr.rel (0) target = $region25
    $region24: #{tpu_custom_call.1} parent=1 // pred_region
      %53 = dma.done [#allocation3], 64
    $region25: #{tpu_custom_call.1} parent=1 // pred_fallthru
      _
    // Predicated region
    $region26: #{tpu_custom_call.1} parent=1 // pred_check
      _
    $region27: #{tpu_custom_call.1} parent=1 // pred_check_branch
      %55 = sbr.rel (0) target = $region29
    $region28: #{tpu_custom_call.1} parent=1 // pred_region
      %56 = dma.done [#allocation6], 256
    $region29: #{tpu_custom_call.1} parent=1 // pred_fallthru
      _
    // Predicated region
    $region30: #{tpu_custom_call.1} parent=1 // pred_check
      _
    $region31: #{tpu_custom_call.1} parent=1 // pred_check_branch
      %58 = sbr.rel (0) target = $region33
    $region32: #{tpu_custom_call.1} parent=1 // pred_region
      %59 = dma.done [#allocation6], 256
    $region33: #{tpu_custom_call.1} parent=1 // pred_fallthru
      _
    %v61 = vld [vmem:[#allocation2] sm:$0xf]
    %v62 = vld [vmem:[#allocation5] sm:$0xf]
    %v63 = vld [vmem:[#allocation5 + $0x4] sm:$0xf]
    %v64 = vld [vmem:[#allocation5 + $0x8] sm:$0xf]
    %v65 = vld [vmem:[#allocation5 + $0xc] sm:$0xf]
    %v66 = vld [vmem:[%s2] sm:$0x1]
    %v68 = vlaneseq
    %v69 = vshrl.u32 %v68, 7
    %v70 = vsub.s32 0, %v69
    %v71 = vrot.slane %v66, %v70
    %v77 = vunpack.c.l.b16 %v62
    %v78 = vunpack.c.l.b16 %v63
    %v79 = vunpack.c.l.b16 %v64
    %v80 = vunpack.c.l.b16 %v65
    %v81 = vpack.c.b16 %v78, %v77
    %v82 = vpack.c.b16 %v80, %v79
    %vm85 = vcmask 261120
    %v87 = vsel %vm85, %v61, 0
    %89 = vmatprep.subr.bf16.mxu0 0
    %90 = vmatpush1.bf16.msra.mxu0 %v81
    %91 = vmatprep.subr.bf16.mxu0 0
    %92 = vmatpush1.bf16.msra.mxu0 %v82
    %93 = vmatprep.subr.bf16.mxu0 0
    %94 = vmatpush1.bf16.msra.mxu0 0
    %95 = vmatprep.subr.bf16.mxu0 0
    %96 = vmatpush1.bf16.msra.mxu0 0
    %97 = vmatprep.subr.bf16.mxu0 0
    %98 = vmatpush1.bf16.msra.mxu0 0
    %99 = vmatprep.subr.bf16.mxu0 0
    %100 = vmatpush1.bf16.msra.mxu0 0
    %101 = vmatprep.subr.bf16.mxu0 0
    %102 = vmatpush1.bf16.msra.mxu0 0
    %103 = vmatprep.subr.bf16.mxu0 0
    %104 = vmatpush1.bf16.msra.mxu0 0
    %105 = vmatprep.subr.bf16.mxu0 0
    %106 = vmatpush1.bf16.msra.mxu0 0
    %107 = vmatprep.subr.bf16.mxu0 0
    %108 = vmatpush1.bf16.msra.mxu0 0
    %109 = vmatprep.subr.bf16.mxu0 0
    %110 = vmatpush1.bf16.msra.mxu0 0
    %111 = vmatprep.subr.bf16.mxu0 0
    %112 = vmatpush1.bf16.msra.mxu0 0
    %113 = vmatprep.subr.bf16.mxu0 0
    %114 = vmatpush1.bf16.msra.mxu0 0
    %115 = vmatprep.subr.bf16.mxu0 0
    %116 = vmatpush1.bf16.msra.mxu0 0
    %117 = vmatprep.subr.bf16.mxu0 0
    %118 = vmatpush1.bf16.msra.mxu0 0
    %119 = vmatprep.subr.bf16.mxu0 0
    %120 = vmatpush1.bf16.msra.mxu0 0
    %121 = vmatprep.mubr.bf16.mxu0 0
    %122 = vmatmul.mubr.bf16.gmra.mrb[0].mxu0 %v87
    %v123 = vpop.f32.mrb[0].mxu0
    %v124 = vadd.f32 %v71, %v123
    %v125 = vpop.f32.mrb[0].mxu0
    %v126 = vpop.f32.mrb[0].mxu0
    %v127 = vpop.f32.mrb[0].mxu0
    %128 = vdwg.mxu0
    %v129 = vtanh.pop %v124
    %v130 = vpack.c.bf16 %v129, %v129
    %v131 = vld [vmem:[#allocation7] sm:$0xf]
    %v132 = vld [vmem:[#allocation7 + $0x4] sm:$0xf]
    %v133 = vld [vmem:[#allocation7 + $0x8] sm:$0xf]
    %v134 = vld [vmem:[#allocation7 + $0xc] sm:$0xf]
    %v135 = vld [vmem:[%s4] sm:$0x1]
    %v137 = vlaneseq
    %v138 = vshrl.u32 %v137, 7
    %v139 = vsub.s32 0, %v138
    %v140 = vrot.slane %v135, %v139
    %v146 = vunpack.c.l.b16 %v131
    %v147 = vunpack.c.l.b16 %v132
    %v148 = vunpack.c.l.b16 %v133
    %v149 = vunpack.c.l.b16 %v134
    %v150 = vpack.c.b16 %v147, %v146
    %v151 = vpack.c.b16 %v149, %v148
    %v155 = vsel %vm85, %v130, 0
    %157 = vmatprep.subr.bf16.mxu0 0
    %158 = vmatpush1.bf16.msra.mxu0 %v150
    %159 = vmatprep.subr.bf16.mxu0 0
    %160 = vmatpush1.bf16.msra.mxu0 %v151
    %161 = vmatprep.subr.bf16.mxu0 0
    %162 = vmatpush1.bf16.msra.mxu0 0
    %163 = vmatprep.subr.bf16.mxu0 0
    %164 = vmatpush1.bf16.msra.mxu0 0
    %165 = vmatprep.subr.bf16.mxu0 0
    %166 = vmatpush1.bf16.msra.mxu0 0
    %167 = vmatprep.subr.bf16.mxu0 0
    %168 = vmatpush1.bf16.msra.mxu0 0
    %169 = vmatprep.subr.bf16.mxu0 0
    %170 = vmatpush1.bf16.msra.mxu0 0
    %171 = vmatprep.subr.bf16.mxu0 0
    %172 = vmatpush1.bf16.msra.mxu0 0
    %173 = vmatprep.subr.bf16.mxu0 0
    %174 = vmatpush1.bf16.msra.mxu0 0
    %175 = vmatprep.subr.bf16.mxu0 0
    %176 = vmatpush1.bf16.msra.mxu0 0
    %177 = vmatprep.subr.bf16.mxu0 0
    %178 = vmatpush1.bf16.msra.mxu0 0
    %179 = vmatprep.subr.bf16.mxu0 0
    %180 = vmatpush1.bf16.msra.mxu0 0
    %181 = vmatprep.subr.bf16.mxu0 0
    %182 = vmatpush1.bf16.msra.mxu0 0
    %183 = vmatprep.subr.bf16.mxu0 0
    %184 = vmatpush1.bf16.msra.mxu0 0
    %185 = vmatprep.subr.bf16.mxu0 0
    %186 = vmatpush1.bf16.msra.mxu0 0
    %187 = vmatprep.subr.bf16.mxu0 0
    %188 = vmatpush1.bf16.msra.mxu0 0
    %189 = vmatprep.mubr.bf16.mxu0 0
    %190 = vmatmul.mubr.bf16.gmra.mrb[0].mxu0 %v155
    %v191 = vpop.f32.mrb[0].mxu0
    %v192 = vadd.f32 %v140, %v191
    %v193 = vpop.f32.mrb[0].mxu0
    %v194 = vpop.f32.mrb[0].mxu0
    %v195 = vpop.f32.mrb[0].mxu0
    %196 = vdwg.mxu0
    %197 = vst.msk [vmem:[#allocation8] sm:$0xff] %vm85, %v192
    // Predicated region
    $region34: #{tpu_custom_call.1} parent=1 // pred_check
      _
    $region35: #{tpu_custom_call.1} parent=1 // pred_check_branch
      %199 = sbr.rel (0) target = $region37
    $region36: #{tpu_custom_call.1} parent=1 // pred_region
      %s201 = ssub.s32 128, 128
      %202 = vsyncadd [#allocation4], %s201
      %s204 = sshll.u32 [#allocation8], 4
      %s205 = int_to_ptr.vmem [resolvable:$true] %s204
      %207 = dma.vmem_to_hbm [thread:$0]  %s205, 128, %s5, [#allocation4]
    $region37: #{tpu_custom_call.1} parent=1 // pred_fallthru
      _
    // Predicated region
    $region38: #{tpu_custom_call.1} parent=1 // pred_check
      _
    $region39: #{tpu_custom_call.1} parent=1 // pred_check_branch
      %209 = sbr.rel (0) target = $region41
    $region40: #{tpu_custom_call.1} parent=1 // pred_region
      %210 = dma.done [#allocation4], 128
    $region41: #{tpu_custom_call.1} parent=1 // pred_fallthru
      _
    %211 = vsyncpa [#allocation3], 1
    %212 = vsyncpa [#allocation6], 1
    %213 = vsyncpa [#allocation4], 1

</llo_original>
